<compile_context>
chip_gen: v5e
topology: v5e:2x2
jax: 0.10.0
libtpu: 0.0.40
codegen_flags: <defaults>
</compile_context>

<pallas_src>
import jax
import jax.numpy as jnp
from jax import lax
from jax.experimental import pallas as pl
from jax.experimental.pallas import tpu as pltpu


def _round_up(x, m):
    return (x + m - 1) // m * m


# ---------------------------------------------------------------------------
# Pass 1: conv as a single matmul over im2col'd rows + per-tile partial BN stats.
#   p_ref:     (TM, Kp)      bf16   im2col patches tile
#   w_ref:     (Kp, Cp)      bf16   folded conv weights (resident across grid)
#   conv_ref:  (TM, Cp)      f32    conv output tile
#   stats_ref: (1, 8, Cp)    f32    row 0 = partial sum, row 1 = partial sum of squares
# ---------------------------------------------------------------------------
def _conv_stats_kernel(p_ref, w_ref, conv_ref, stats_ref):
    acc = jnp.dot(p_ref[...], w_ref[...], preferred_element_type=jnp.float32)
    conv_ref[...] = acc
    s1 = jnp.sum(acc, axis=0, keepdims=True)         # (1, Cp)
    s2 = jnp.sum(acc * acc, axis=0, keepdims=True)   # (1, Cp)
    pad = jnp.zeros((6, acc.shape[1]), jnp.float32)  # pad to a full (8, Cp) sublane tile
    stats_ref[...] = jnp.concatenate([s1, s2, pad], axis=0)[None]


# ---------------------------------------------------------------------------
# Pass 2: y = relu(conv * scale + bias), scale = rsqrt(var+eps), bias = -mean*scale.
# ---------------------------------------------------------------------------
def _bn_relu_kernel(conv_ref, sb_ref, out_ref):
    y = conv_ref[...]
    scale = sb_ref[0:1, :]
    bias = sb_ref[1:2, :]
    out_ref[...] = jnp.maximum(y * scale + bias, 0.0)


def conv_bn_relu(x_nchw, weight_oihw, *, eps=1e-5, block_rows=256):
    """Matches ConvBN.forward (training-mode BN, affine=False), stride=1, dilation=1.

    x_nchw:      (N, Cin, H, W)      float32
    weight_oihw: (Cout, Cin, KH, KW) float32
    returns      (N, Cout, H, W)     float32
    """
    N, Cin, H, W = x_nchw.shape
    Cout, _, KH, KW = weight_oihw.shape
    ph, pw = KH // 2, KW // 2  # padding=1 for the 3x3 default
    # TODO(synk): stride != 1 / dilation != 1 not implemented (module defaults only).

    # --- XLA-side layout plumbing ------------------------------------------
    x_nhwc = jnp.transpose(x_nchw, (0, 2, 3, 1))
    x_pad = jnp.pad(x_nhwc, ((0, 0), (ph, ph), (pw, pw), (0, 0)))

    # im2col: fold the KH*KW taps into the contraction dim -> one matmul per tile.
    cols = [x_pad[:, kh:kh + H, kw:kw + W, :] for kh in range(KH) for kw in range(KW)]
    patches = jnp.concatenate(cols, axis=-1).reshape(N * H * W, KH * KW * Cin)
    w2d = jnp.transpose(weight_oihw, (2, 3, 1, 0)).reshape(KH * KW * Cin, Cout)

    R = N * H * W
    K = KH * KW * Cin
    TM = max(8, _round_up(block_rows, 8))
    Rp = _round_up(R, TM)
    Kp = _round_up(K, 8)        # sublane-friendly contraction dim
    Cp = _round_up(Cout, 128)   # lane-dense output channels
    n_tiles = Rp // TM

    # bf16 MXU operands (f32 accumulation in-kernel). Zero-padded rows/channels
    # contribute exactly 0 to the conv and to the BN sums, so stats stay correct
    # (the divisor below uses the real element count R).
    patches = jnp.pad(patches, ((0, Rp - R), (0, Kp - K))).astype(jnp.bfloat16)
    w2d = jnp.pad(w2d, ((0, Kp - K), (0, Cp - Cout))).astype(jnp.bfloat16)

    parallel = pltpu.CompilerParams(dimension_semantics=("parallel",))

    conv_flat, partial = pl.pallas_call(
        _conv_stats_kernel,
        out_shape=(jax.ShapeDtypeStruct((Rp, Cp), jnp.float32),
                   jax.ShapeDtypeStruct((n_tiles, 8, Cp), jnp.float32)),
        grid=(n_tiles,),
        in_specs=[pl.BlockSpec((TM, Kp), lambda i: (i, 0)),
                  pl.BlockSpec((Kp, Cp), lambda i: (0, 0))],  # weights stay resident
        out_specs=(pl.BlockSpec((TM, Cp), lambda i: (i, 0)),
                   pl.BlockSpec((1, 8, Cp), lambda i: (i, 0, 0))),
        compiler_params=parallel,
        cost_estimate=pl.CostEstimate(
            flops=2 * Rp * Kp * Cp,
            transcendentals=0,
            bytes_accessed=(Rp * Kp * 2 + Kp * Cp * 2
                            + Rp * Cp * 4 + n_tiles * 8 * Cp * 4)),
    )(patches, w2d)

    # Finalize BN statistics on a tiny per-channel array (all f32).
    count = jnp.float32(R)
    mean = jnp.sum(partial[:, 0, :], axis=0) / count
    ex2 = jnp.sum(partial[:, 1, :], axis=0) / count
    var = jnp.maximum(ex2 - mean * mean, 0.0)          # biased variance (BN training)
    scale = lax.rsqrt(var + eps)
    bias = -mean * scale
    scale_bias = jnp.stack([scale, bias], axis=0)      # (2, Cp)

    out_flat = pl.pallas_call(
        _bn_relu_kernel,
        out_shape=jax.ShapeDtypeStruct((Rp, Cp), jnp.float32),
        grid=(n_tiles,),
        in_specs=[pl.BlockSpec((TM, Cp), lambda i: (i, 0)),
                  pl.BlockSpec((2, Cp), lambda i: (0, 0))],
        out_specs=pl.BlockSpec((TM, Cp), lambda i: (i, 0)),
        compiler_params=parallel,
        cost_estimate=pl.CostEstimate(
            flops=2 * Rp * Cp,
            transcendentals=0,
            bytes_accessed=2 * Rp * Cp * 4 + 2 * Cp * 4),
    )(conv_flat, scale_bias)

    # Reshapes/slices outside the kernel are free metadata in XLA.
    out = out_flat[:R, :Cout].reshape(N, H, W, Cout)
    return jnp.transpose(out, (0, 3, 1, 2))


def _reference(x_nchw, weight_oihw, eps=1e-5):
    """Pure-JAX reference matching PyTorch ConvBN forward (training mode)."""
    conv = lax.conv_general_dilated(
        x_nchw, weight_oihw, window_strides=(1, 1), padding=((1, 1), (1, 1)),
        dimension_numbers=("NCHW", "OIHW", "NCHW"))
    mean = jnp.mean(conv, axis=(0, 2, 3), keepdims=True)
    var = jnp.var(conv, axis=(0, 2, 3), keepdims=True)   # biased
    y = (conv - mean) * lax.rsqrt(var + eps)
    return jnp.maximum(y, 0.0)


if __name__ == "__main__":
    key = jax.random.PRNGKey(0)
    k_x, k_w = jax.random.split(key)

    N, Cin, Cout, H, W, Ksz = 2, 4, 8, 16, 16, 3

    x = jax.random.normal(k_x, (N, Cin, H, W), dtype=jnp.float32)
    fan_in = Cin * Ksz * Ksz
    bound = 1.0 / (fan_in ** 0.5)
    weight = jax.random.uniform(k_w, (Cout, Cin, Ksz, Ksz), dtype=jnp.float32,
                                minval=-bound, maxval=bound)

    out = jax.block_until_ready(conv_bn_relu(x, weight, block_rows=256))

    # Reference computed on the same bf16-rounded operands the MXU consumes, so the
    # check isolates kernel correctness from the intentional bf16 operand cast.
    x_r = x.astype(jnp.bfloat16).astype(jnp.float32)
    w_r = weight.astype(jnp.bfloat16).astype(jnp.float32)
    ref = _reference(x_r, w_r)

    assert out.shape == (N, Cout, H, W)
    assert jnp.allclose(out, ref, atol=1e-4, rtol=1e-4), "mismatch vs reference"

    print("KERNEL_OK")
</pallas_src>

<mosaic_0001>
module attributes {stable_mosaic.version = 11 : i64} {
  func.func @_conv_stats_kernel(%arg0: i32, %arg1: memref<256x40xbf16, #tpu.memory_space<vmem>>, %arg2: memref<40x128xbf16, #tpu.memory_space<vmem>>, %arg3: memref<256x128xf32, #tpu.memory_space<vmem>>, %arg4: memref<1x8x128xf32, #tpu.memory_space<vmem>>) attributes {dimension_semantics = [#tpu.dimension_semantics<parallel>], iteration_bounds = array<i64: 2>, scalar_prefetch = 0 : i64, scratch_operands = 0 : i64, tpu.core_type = #tpu.core_type<tc>, window_params = [{transform_indices = @transform_0, window_bounds = array<i64: 256, 40>}, {pipeline_mode = #tpu.pipeline_mode<synchronous>, transform_indices = @transform_1, window_bounds = array<i64: 40, 128>}, {transform_indices = @transform_2, window_bounds = array<i64: 256, 128>}, {transform_indices = @transform_3, window_bounds = array<i64: 1, 8, 128>}]} {
    %c0 = arith.constant 0 : index
    %c0_0 = arith.constant 0 : index
    %0 = vector.load %arg1[%c0, %c0_0] : memref<256x40xbf16, #tpu.memory_space<vmem>>, vector<256x40xbf16>
    %c0_1 = arith.constant 0 : index
    %c0_2 = arith.constant 0 : index
    %1 = vector.load %arg2[%c0_1, %c0_2] : memref<40x128xbf16, #tpu.memory_space<vmem>>, vector<40x128xbf16>
    %cst = arith.constant dense<0.000000e+00> : vector<256x128xf32>
    %2 = tpu.matmul %0, %1, %cst {dimension_numbers = #tpu.dot_dimension_numbers<[1], [0], [0], [1], [0, 0, 1, 1], [], []>} : vector<256x40xbf16>, vector<40x128xbf16>, vector<256x128xf32> -> vector<256x128xf32>
    %c0_3 = arith.constant 0 : index
    %c0_4 = arith.constant 0 : index
    %3 = vector.load %arg3[%c0_3, %c0_4] : memref<256x128xf32, #tpu.memory_space<vmem>>, vector<256x128xf32>
    tpu.vector_store %arg3[%c0_3, %c0_4], %2 {strides = array<i32>} : memref<256x128xf32, #tpu.memory_space<vmem>>, vector<256x128xf32>,
    %cst_5 = arith.constant dense<0.000000e+00> : vector<128xf32>
    %4 = vector.multi_reduction <add>, %2, %cst_5 [0] : vector<256x128xf32> to vector<128xf32>
    %5 = vector.shape_cast %4 : vector<128xf32> to vector<1x128xf32>
    %6 = arith.mulf %2, %2 : vector<256x128xf32>
    %cst_6 = arith.constant dense<0.000000e+00> : vector<128xf32>
    %7 = vector.multi_reduction <add>, %6, %cst_6 [0] : vector<256x128xf32> to vector<128xf32>
    %8 = vector.shape_cast %7 : vector<128xf32> to vector<1x128xf32>
    %cst_7 = arith.constant 0.000000e+00 : f32
    %9 = vector.broadcast %cst_7 : f32 to vector<6x128xf32>
    %10 = tpu.concatenate %5, %8, %9 in 0 : vector<1x128xf32>, vector<1x128xf32>, vector<6x128xf32> -> vector<8x128xf32>
    %11 = vector.shape_cast %10 : vector<8x128xf32> to vector<1x8x128xf32>
    %c0_8 = arith.constant 0 : index
    %c0_9 = arith.constant 0 : index
    %c0_10 = arith.constant 0 : index
    %12 = vector.load %arg4[%c0_8, %c0_9, %c0_10] : memref<1x8x128xf32, #tpu.memory_space<vmem>>, vector<1x8x128xf32>
    tpu.vector_store %arg4[%c0_8, %c0_9, %c0_10], %11 {strides = array<i32>} : memref<1x8x128xf32, #tpu.memory_space<vmem>>, vector<1x8x128xf32>,
    return
  }
  func.func @transform_0(%arg0: i32) -> (i32, i32) {
    %c0_i32 = arith.constant 0 : i32
    %c0_i32_0 = arith.constant 0 : i32
    return %arg0, %c0_i32 : i32, i32
  }
  func.func @transform_1(%arg0: i32) -> (i32, i32) {
    %c0_i32 = arith.constant 0 : i32
    %c0_i32_0 = arith.constant 0 : i32
    %c0_i32_1 = arith.constant 0 : i32
    return %c0_i32, %c0_i32_0 : i32, i32
  }
  func.func @transform_2(%arg0: i32) -> (i32, i32) {
    %c0_i32 = arith.constant 0 : i32
    %c0_i32_0 = arith.constant 0 : i32
    return %arg0, %c0_i32 : i32, i32
  }
  func.func @transform_3(%arg0: i32) -> (i32, i32, i32) {
    %c0_i32 = arith.constant 0 : i32
    %c0_i32_0 = arith.constant 0 : i32
    %c0_i32_1 = arith.constant 0 : i32
    return %arg0, %c0_i32, %c0_i32_0 : i32, i32, i32
  }
}

</mosaic_0001>

<llo_original>
// kernel: tpu_custom_call.1
$region0: #{tpu_custom_call.1}
  #allocation0 [shape = 'u32[]', space=smem, size = 0x4, offset = 0x4, fixed_abs, tag = 'smem constant byte address 0x4 - core index']
  #allocation1 [shape = 'u32[72,128]{1,0:T(1,128)}', space=vmem, size = 0x9000, scoped, tag = 'internal scratch']
  %s0 = inlined_call_operand.vmem [shape: bf16[512,40], index: 0, kind: input, shape index: {}]
  %s1 = inlined_call_operand.vmem [shape: bf16[40,128], index: 1, kind: input, shape index: {}]
  %s2 = inlined_call_operand.hbm [shape: f32[512,128], index: 2, kind: output, shape index: {0}]
  %s3 = inlined_call_operand.hbm [shape: f32[2,8,128], index: 3, kind: output, shape index: {1}]
  %4 = xla_tuple %s2, %s3
  %s5 = sld [smem:[#allocation0]]
  $region49: #{tpu_custom_call.1} parent=0
    _
  %s7 = ssub.s32 1, %s5
  %s8 = scalar_select 0, %s7, %s5
  $region1: #{tpu_custom_call.1} parent=0
    #allocation2 [shape = 'u8[262144]{0}', space=vmem, size = 0x40000, scoped, tag = 'output window, operand 0']
    #allocation3 [shape = 's32[2]{0}', space=sflag, size = 0x8, scoped, tag = 'scoped memory for tpu_custom_call.1']
    #allocation4 [shape = 'u8[8192]{0}', space=vmem, size = 0x2000, scoped, tag = 'output window, operand 1']
    #allocation5 [shape = 's32[2]{0}', space=sflag, size = 0x8, scoped, tag = 'scoped memory for tpu_custom_call.1']
    %9 = vsyncpa [#allocation3], 0
    %s10 = scalar_lea.sflag [#allocation3], 1
    %11 = vsyncpa %s10, 0
    %12 = vsyncpa [#allocation5], 0
    %s13 = scalar_lea.sflag [#allocation5], 1
    %14 = vsyncpa %s13, 0
    loop: start=0, step=1, limit=4
    $region2: #{tpu_custom_call.1} parent=1 // loop_pre_header
      _
    $region3: #{tpu_custom_call.1} parent=1 // loop_header
      %s16 = sphi 0, %s20
      %p17 = scmp.ge.s32.totalorder %s16, 4
      %s26 = sphi 0, %s28
      %s29 = sphi 0, %s26
      %s30 = sphi 0, %s29
      %s46 = sphi 0, %s30
      %s50 = sphi 0, %s50
      %s52 = sphi 0, %s50
      %s53 = sphi 0, %s52
      %s67 = sphi 0, %s53
      %s73 = sphi 0, %s75
      %s76 = sphi 0, %s73
      %s77 = sphi 0, %s76
      %s93 = sphi 0, %s77
      %s99 = sphi 0, %s101
      %s102 = sphi 0, %s99
      %s103 = sphi 0, %s102
      %s119 = sphi 0, %s103
    $region4: #{tpu_custom_call.1} parent=1 // loop_header_branch
      %19 = sbr.rel (%p17) target = $region8
    $region5: #{tpu_custom_call.1} parent=1 // loop_body
      %s21 = ssub.s32 %s16, 1
      %s22 = ssub.s32 %s16, 2
      %s23 = sadd.s32 %s16, 1
      %s24 = ssub.s32 %s16, %s23
      %p25 = scmp.eq.s32.totalorder %s24, 0
      %s27 = sadd.s32 %s26, 1
      %s28 = scalar_select %p25, %s26, %s27
      %p31 = pneg %p25
      %p32 = scmp.eq.s32.totalorder %s16, 1
      %p33 = por %p31, %p32
      %p34 = scmp.ne.s32.totalorder %s26, %s29
      %p35 = scmp.eq.s32.totalorder %s16, 0
      %p36 = por %p34, %p35
      %p37 = scmp.ne.s32.totalorder %s26, %s29
      %p38 = scmp.eq.s32.totalorder %s21, 1
      %p39 = por %p37, %p38
      %p40 = scmp.ne.s32.totalorder %s29, %s30
      %p41 = scmp.eq.s32.totalorder %s21, 0
      %p42 = por %p40, %p41
      %p43 = scmp.ne.s32.totalorder %s29, %s30
      %p44 = scmp.eq.s32.totalorder %s22, 1
      %p45 = por %p43, %p44
      %p47 = scmp.ne.s32.totalorder %s30, %s46
      %p48 = scmp.eq.s32.totalorder %s22, 0
      %p49 = por %p47, %p48
      %s51 = sadd.s32 %s50, 1
      %p54 = scmp.eq.s32.totalorder %s16, 1
      %p55 = scmp.ne.s32.totalorder %s50, %s52
      %p56 = scmp.eq.s32.totalorder %s16, 0
      %p57 = por %p55, %p56
      %p58 = scmp.ne.s32.totalorder %s50, %s52
      %p59 = scmp.eq.s32.totalorder %s21, 1
      %p60 = por %p58, %p59
      %p61 = scmp.ne.s32.totalorder %s52, %s53
      %p62 = scmp.eq.s32.totalorder %s21, 0
      %p63 = por %p61, %p62
      %p64 = scmp.ne.s32.totalorder %s52, %s53
      %p65 = scmp.eq.s32.totalorder %s22, 1
      %p66 = por %p64, %p65
      %p68 = scmp.ne.s32.totalorder %s53, %s67
      %p69 = scmp.eq.s32.totalorder %s22, 0
      %p70 = por %p68, %p69
      %s71 = ssub.s32 %s16, %s23
      %p72 = scmp.eq.s32.totalorder %s71, 0
      %s74 = sadd.s32 %s73, 1
      %s75 = scalar_select %p72, %s73, %s74
      %p78 = pneg %p72
      %p79 = scmp.eq.s32.totalorder %s16, 1
      %p80 = por %p78, %p79
      %p81 = scmp.ne.s32.totalorder %s73, %s76
      %p82 = scmp.eq.s32.totalorder %s16, 0
      %p83 = por %p81, %p82
      %p84 = scmp.ne.s32.totalorder %s73, %s76
      %p85 = scmp.eq.s32.totalorder %s21, 1
      %p86 = por %p84, %p85
      %p87 = scmp.ne.s32.totalorder %s76, %s77
      %p88 = scmp.eq.s32.totalorder %s21, 0
      %p89 = por %p87, %p88
      %p90 = scmp.ne.s32.totalorder %s76, %s77
      %p91 = scmp.eq.s32.totalorder %s22, 1
      %p92 = por %p90, %p91
      %p94 = scmp.ne.s32.totalorder %s77, %s93
      %p95 = scmp.eq.s32.totalorder %s22, 0
      %p96 = por %p94, %p95
      %s97 = ssub.s32 %s16, %s23
      %p98 = scmp.eq.s32.totalorder %s97, 0
      %s100 = sadd.s32 %s99, 1
      %s101 = scalar_select %p98, %s99, %s100
      %p104 = pneg %p98
      %p105 = scmp.eq.s32.totalorder %s16, 1
      %p106 = por %p104, %p105
      %p107 = scmp.ne.s32.totalorder %s99, %s102
      %p108 = scmp.eq.s32.totalorder %s16, 0
      %p109 = por %p107, %p108
      %p110 = scmp.ne.s32.totalorder %s99, %s102
      %p111 = scmp.eq.s32.totalorder %s21, 1
      %p112 = por %p110, %p111
      %p113 = scmp.ne.s32.totalorder %s102, %s103
      %p114 = scmp.eq.s32.totalorder %s21, 0
      %p115 = por %p113, %p114
      %p116 = scmp.ne.s32.totalorder %s102, %s103
      %p117 = scmp.eq.s32.totalorder %s22, 1
      %p118 = por %p116, %p117
      %p120 = scmp.ne.s32.totalorder %s103, %s119
      %p121 = scmp.eq.s32.totalorder %s22, 0
      %p122 = por %p120, %p121
      %p123 = scmp.le.s32.totalorder 1, %s16
      %p124 = scmp.lt.s32.totalorder %s16, 3
      %p125 = pnand %p123, %p124
      %p126 = pneg %p125
      // Predicated region
      $region9: #{tpu_custom_call.1} parent=5 // pred_check
        _
      $region10: #{tpu_custom_call.1} parent=5 // pred_check_branch
        %128 = sbr.rel (%p125) target = $region12
      $region11: #{tpu_custom_call.1} parent=5 // pred_region
        %s129 = ssub.s32 %s16, 1
        // Predicated region
        $region13: #{tpu_custom_call.1} parent=11 // pred_check
          %p130 = pneg %p63
        $region14: #{tpu_custom_call.1} parent=11 // pred_check_branch
          %132 = sbr.rel (%p130) target = $region16
        $region15: #{tpu_custom_call.1} parent=11 // pred_region
          _
        $region16: #{tpu_custom_call.1} parent=11 // pred_fallthru
          _
      $region12: #{tpu_custom_call.1} parent=5 // pred_fallthru
        _
      %p133 = scmp.lt.s32.totalorder %s16, 2
      // Predicated region
      $region17: #{tpu_custom_call.1} parent=5 // pred_check
        %p134 = pneg %p133
      $region18: #{tpu_custom_call.1} parent=5 // pred_check_branch
        %136 = sbr.rel (%p134) target = $region20
      $region19: #{tpu_custom_call.1} parent=5 // pred_region
        // Predicated region
        $region21: #{tpu_custom_call.1} parent=19 // pred_check
          %p137 = pneg %p36
        $region22: #{tpu_custom_call.1} parent=19 // pred_check_branch
          %139 = sbr.rel (%p137) target = $region24
        $region23: #{tpu_custom_call.1} parent=19 // pred_region
          %s140 = smul.u32 32, %s16
          %p141 = scmp.lt.s32.totalorder %s140, 63
          %s142 = scalar_select %p141, %s140, 63
          %s143 = smul.addr %s142, 4
          %s144 = scalar_lea.vmem %s0, %s143
          %s145 = smul.u32 32, %s16
        $region24: #{tpu_custom_call.1} parent=19 // pred_fallthru
          _
      $region20: #{tpu_custom_call.1} parent=5 // pred_fallthru
        _
      %p146 = scmp.le.s32.totalorder 1, %s16
      %p147 = scmp.lt.s32.totalorder %s16, 3
      %p148 = pnand %p146, %p147
      %p149 = pneg %p148
      // Predicated region
      $region25: #{tpu_custom_call.1} parent=5 // pred_check
        _
      $region26: #{tpu_custom_call.1} parent=5 // pred_check_branch
        %151 = sbr.rel (%p148) target = $region28
      $region27: #{tpu_custom_call.1} parent=5 // pred_region
        %s152 = ssub.s32 %s16, 1
        %s153 = smul.u32 32, %s21
        %p154 = scmp.lt.s32.totalorder %s153, 63
        %s155 = scalar_select %p154, %s153, 63
        %s156 = smul.addr %s155, 4
        %s157 = scalar_lea.vmem %s0, %s156
        %p158 = pneg %p42
        %p159 = pneg %p39
        %p160 = pneg %p63
        %p161 = pneg %p60
        %p162 = pneg %p89
        %p163 = pneg %p86
        %s164 = sand.u32 %s76, 1
        %s165 = scalar_lea.sflag [#allocation3], %s164
        %s166 = sand.u32 %s76, 1
        %s167 = smul.addr %s166, 256
        %s168 = scalar_lea.vmem [#allocation2], %s167
        %p169 = pneg %p115
        %p170 = pneg %p112
        %s171 = sand.u32 %s102, 1
        %s172 = scalar_lea.sflag [#allocation5], %s171
        %s173 = sand.u32 %s102, 1
        %s174 = smul.addr %s173, 8
        %s175 = scalar_lea.vmem [#allocation4], %s174
        %s176 = smul.u32 32, %s21
        %p177 = scmp.lt.s32.totalorder %s176, 63
        %s178 = scalar_select %p177, %s176, 63
        %s179 = smul.addr %s178, 4
        %s180 = scalar_lea.vmem %s0, %s179
        %s181 = smul.u32 32, %s21
        %s182 = smul.u32 32, %s21
        %v184 = vld [vmem:[%s180] sm:$0xf]
        %v185 = vld [vmem:[%s180 + $0x4] sm:$0xf]
        %v186 = vld [vmem:[%s180 + $0x8] sm:$0xf]
        %v187 = vld [vmem:[%s180 + $0xc] sm:$0xf]
        %v188 = vld [vmem:[%s180 + $0x10] sm:$0xf]
        %v189 = vld [vmem:[%s180 + $0x14] sm:$0xf]
        %v190 = vld [vmem:[%s180 + $0x18] sm:$0xf]
        %v191 = vld [vmem:[%s180 + $0x1c] sm:$0xf]
        %v192 = vld [vmem:[%s180 + $0x20] sm:$0xf]
        %v193 = vld [vmem:[%s180 + $0x24] sm:$0xf]
        %v194 = vld [vmem:[%s180 + $0x28] sm:$0xf]
        %v195 = vld [vmem:[%s180 + $0x2c] sm:$0xf]
        %v196 = vld [vmem:[%s180 + $0x30] sm:$0xf]
        %v197 = vld [vmem:[%s180 + $0x34] sm:$0xf]
        %v198 = vld [vmem:[%s180 + $0x38] sm:$0xf]
        %v199 = vld [vmem:[%s180 + $0x3c] sm:$0xf]
        %v200 = vld [vmem:[%s180 + $0x40] sm:$0xf]
        %v201 = vld [vmem:[%s180 + $0x44] sm:$0xf]
        %v202 = vld [vmem:[%s180 + $0x48] sm:$0xf]
        %v203 = vld [vmem:[%s180 + $0x4c] sm:$0xf]
        %v204 = vld [vmem:[%s180 + $0x50] sm:$0xf]
        %v205 = vld [vmem:[%s180 + $0x54] sm:$0xf]
        %v206 = vld [vmem:[%s180 + $0x58] sm:$0xf]
        %v207 = vld [vmem:[%s180 + $0x5c] sm:$0xf]
        %v208 = vld [vmem:[%s180 + $0x60] sm:$0xf]
        %v209 = vld [vmem:[%s180 + $0x64] sm:$0xf]
        %v210 = vld [vmem:[%s180 + $0x68] sm:$0xf]
        %v211 = vld [vmem:[%s180 + $0x6c] sm:$0xf]
        %v212 = vld [vmem:[%s180 + $0x70] sm:$0xf]
        %v213 = vld [vmem:[%s180 + $0x74] sm:$0xf]
        %v214 = vld [vmem:[%s180 + $0x78] sm:$0xf]
        %v215 = vld [vmem:[%s180 + $0x7c] sm:$0xf]
        %v216 = vld [vmem:[%s1] sm:$0xf]
        %v217 = vld [vmem:[%s1 + $0x4] sm:$0xf]
        %v218 = vld [vmem:[%s1 + $0x8] sm:$0xf]
        %v219 = vld [vmem:[%s1 + $0xc] sm:$0xf]
        %v220 = vld [vmem:[%s1 + $0x10] sm:$0xf]
        %v253 = vunpack.c.l.b16 %v184
        %v254 = vunpack.c.l.b16 %v185
        %v255 = vunpack.c.l.b16 %v186
        %v256 = vunpack.c.l.b16 %v187
        %v257 = vunpack.c.l.b16 %v188
        %v258 = vunpack.c.l.b16 %v189
        %v259 = vunpack.c.l.b16 %v190
        %v260 = vunpack.c.l.b16 %v191
        %v261 = vunpack.c.l.b16 %v192
        %v262 = vunpack.c.l.b16 %v193
        %v263 = vunpack.c.l.b16 %v194
        %v264 = vunpack.c.l.b16 %v195
        %v265 = vunpack.c.l.b16 %v196
        %v266 = vunpack.c.l.b16 %v197
        %v267 = vunpack.c.l.b16 %v198
        %v268 = vunpack.c.l.b16 %v199
        %v269 = vunpack.c.l.b16 %v200
        %v270 = vunpack.c.l.b16 %v201
        %v271 = vunpack.c.l.b16 %v202
        %v272 = vunpack.c.l.b16 %v203
        %v273 = vunpack.c.l.b16 %v204
        %v274 = vunpack.c.l.b16 %v205
        %v275 = vunpack.c.l.b16 %v206
        %v276 = vunpack.c.l.b16 %v207
        %v277 = vunpack.c.l.b16 %v208
        %v278 = vunpack.c.l.b16 %v209
        %v279 = vunpack.c.l.b16 %v210
        %v280 = vunpack.c.l.b16 %v211
        %v281 = vunpack.c.l.b16 %v212
        %v282 = vunpack.c.l.b16 %v213
        %v283 = vunpack.c.l.b16 %v214
        %v284 = vunpack.c.l.b16 %v215
        %v285 = vpack.c.b16 %v254, %v253
        %v286 = vpack.c.b16 %v256, %v255
        %v287 = vpack.c.b16 %v258, %v257
        %v288 = vpack.c.b16 %v260, %v259
        %v289 = vpack.c.b16 %v262, %v261
        %v290 = vpack.c.b16 %v264, %v263
        %v291 = vpack.c.b16 %v266, %v265
        %v292 = vpack.c.b16 %v268, %v267
        %v293 = vpack.c.b16 %v270, %v269
        %v294 = vpack.c.b16 %v272, %v271
        %v295 = vpack.c.b16 %v274, %v273
        %v296 = vpack.c.b16 %v276, %v275
        %v297 = vpack.c.b16 %v278, %v277
        %v298 = vpack.c.b16 %v280, %v279
        %v299 = vpack.c.b16 %v282, %v281
        %v300 = vpack.c.b16 %v284, %v283
        %v306 = vunpack.c.l.b16 %v216
        %v307 = vunpack.c.l.b16 %v217
        %v308 = vunpack.c.l.b16 %v218
        %v309 = vunpack.c.l.b16 %v219
        %v310 = vunpack.c.l.b16 %v220
        %v311 = vpack.c.b16 %v307, %v306
        %v312 = vpack.c.b16 %v309, %v308
        %v313 = vpack.c.b16 %v310, %v310
        %vm316 = vcmask 326656
        %v318 = vsel %vm316, %v285, 0
        %v321 = vsel %vm316, %v286, 0
        %v324 = vsel %vm316, %v287, 0
        %v327 = vsel %vm316, %v288, 0
        %v330 = vsel %vm316, %v289, 0
        %v333 = vsel %vm316, %v290, 0
        %v336 = vsel %vm316, %v291, 0
        %v339 = vsel %vm316, %v292, 0
        %v342 = vsel %vm316, %v293, 0
        %v345 = vsel %vm316, %v294, 0
        %v348 = vsel %vm316, %v295, 0
        %v351 = vsel %vm316, %v296, 0
        %v354 = vsel %vm316, %v297, 0
        %v357 = vsel %vm316, %v298, 0
        %v360 = vsel %vm316, %v299, 0
        %v363 = vsel %vm316, %v300, 0
        %vm365 = vcmask 1043456
        %v367 = vsel %vm365, %v313, 0
        %369 = vmatpush.bf16.msra.mxu0 0
        %370 = vmatpush.bf16.msra.mxu0 0
        %371 = vmatpush.bf16.msra.mxu0 0
        %372 = vmatpush.bf16.msra.mxu0 0
        %373 = vmatpush.bf16.msra.mxu0 0
        %374 = vmatpush.bf16.msra.mxu0 %v367
        %375 = vmatpush.bf16.msra.mxu0 %v312
        %376 = vmatpush.bf16.msra.mxu0 %v311
        %377 = vmatmul.bf16.gmra.mxu0 %v318
        %v378 = vpop.f32.mrf.mxu0
        %v379 = vadd.f32 0.0, %v378
        %v380 = vpop.f32.mrf.mxu0
        %v381 = vadd.f32 0.0, %v380
        %382 = vmatmul.bf16.gmra.mxu0 %v321
        %v383 = vpop.f32.mrf.mxu0
        %v384 = vadd.f32 0.0, %v383
        %v385 = vpop.f32.mrf.mxu0
        %v386 = vadd.f32 0.0, %v385
        %387 = vmatmul.bf16.gmra.mxu0 %v324
        %v388 = vpop.f32.mrf.mxu0
        %v389 = vadd.f32 0.0, %v388
        %v390 = vpop.f32.mrf.mxu0
        %v391 = vadd.f32 0.0, %v390
        %392 = vmatmul.bf16.gmra.mxu0 %v327
        %v393 = vpop.f32.mrf.mxu0
        %v394 = vadd.f32 0.0, %v393
        %v395 = vpop.f32.mrf.mxu0
        %v396 = vadd.f32 0.0, %v395
        %397 = vmatmul.bf16.gmra.mxu0 %v330
        %v398 = vpop.f32.mrf.mxu0
        %v399 = vadd.f32 0.0, %v398
        %v400 = vpop.f32.mrf.mxu0
        %v401 = vadd.f32 0.0, %v400
        %402 = vmatmul.bf16.gmra.mxu0 %v333
        %v403 = vpop.f32.mrf.mxu0
        %v404 = vadd.f32 0.0, %v403
        %v405 = vpop.f32.mrf.mxu0
        %v406 = vadd.f32 0.0, %v405
        %407 = vmatmul.bf16.gmra.mxu0 %v336
        %v408 = vpop.f32.mrf.mxu0
        %v409 = vadd.f32 0.0, %v408
        %v410 = vpop.f32.mrf.mxu0
        %v411 = vadd.f32 0.0, %v410
        %412 = vmatmul.bf16.gmra.mxu0 %v339
        %v413 = vpop.f32.mrf.mxu0
        %v414 = vadd.f32 0.0, %v413
        %v415 = vpop.f32.mrf.mxu0
        %v416 = vadd.f32 0.0, %v415
        %417 = vmatmul.bf16.gmra.mxu0 %v342
        %v418 = vpop.f32.mrf.mxu0
        %v419 = vadd.f32 0.0, %v418
        %v420 = vpop.f32.mrf.mxu0
        %v421 = vadd.f32 0.0, %v420
        %422 = vmatmul.bf16.gmra.mxu0 %v345
        %v423 = vpop.f32.mrf.mxu0
        %v424 = vadd.f32 0.0, %v423
        %v425 = vpop.f32.mrf.mxu0
        %v426 = vadd.f32 0.0, %v425
        %427 = vmatmul.bf16.gmra.mxu0 %v348
        %v428 = vpop.f32.mrf.mxu0
        %v429 = vadd.f32 0.0, %v428
        %v430 = vpop.f32.mrf.mxu0
        %v431 = vadd.f32 0.0, %v430
        %432 = vmatmul.bf16.gmra.mxu0 %v351
        %v433 = vpop.f32.mrf.mxu0
        %v434 = vadd.f32 0.0, %v433
        %v435 = vpop.f32.mrf.mxu0
        %v436 = vadd.f32 0.0, %v435
        %437 = vmatmul.bf16.gmra.mxu0 %v354
        %v438 = vpop.f32.mrf.mxu0
        %v439 = vadd.f32 0.0, %v438
        %v440 = vpop.f32.mrf.mxu0
        %v441 = vadd.f32 0.0, %v440
        %442 = vmatmul.bf16.gmra.mxu0 %v357
        %v443 = vpop.f32.mrf.mxu0
        %v444 = vadd.f32 0.0, %v443
        %v445 = vpop.f32.mrf.mxu0
        %v446 = vadd.f32 0.0, %v445
        %447 = vmatmul.bf16.gmra.mxu0 %v360
        %v448 = vpop.f32.mrf.mxu0
        %v449 = vadd.f32 0.0, %v448
        %v450 = vpop.f32.mrf.mxu0
        %v451 = vadd.f32 0.0, %v450
        %452 = vmatmul.bf16.gmra.mxu0 %v363
        %v453 = vpop.f32.mrf.mxu0
        %v454 = vadd.f32 0.0, %v453
        %v455 = vpop.f32.mrf.mxu0
        %v456 = vadd.f32 0.0, %v455
        %457 = vdwg.mxu0
        %458 = vst [vmem:[%s168] sm:$0xff] %v379
        %459 = vst [vmem:[%s168 + $0x8] sm:$0xff] %v381
        %460 = vst [vmem:[%s168 + $0x10] sm:$0xff] %v384
        %461 = vst [vmem:[%s168 + $0x18] sm:$0xff] %v386
        %462 = vst [vmem:[%s168 + $0x20] sm:$0xff] %v389
        %463 = vst [vmem:[%s168 + $0x28] sm:$0xff] %v391
        %464 = vst [vmem:[%s168 + $0x30] sm:$0xff] %v394
        %465 = vst [vmem:[%s168 + $0x38] sm:$0xff] %v396
        %466 = vst [vmem:[%s168 + $0x40] sm:$0xff] %v399
        %467 = vst [vmem:[%s168 + $0x48] sm:$0xff] %v401
        %468 = vst [vmem:[%s168 + $0x50] sm:$0xff] %v404
        %469 = vst [vmem:[%s168 + $0x58] sm:$0xff] %v406
        %470 = vst [vmem:[%s168 + $0x60] sm:$0xff] %v409
        %471 = vst [vmem:[%s168 + $0x68] sm:$0xff] %v411
        %472 = vst [vmem:[%s168 + $0x70] sm:$0xff] %v414
        %473 = vst [vmem:[%s168 + $0x78] sm:$0xff] %v416
        %474 = vst [vmem:[%s168 + $0x80] sm:$0xff] %v419
        %475 = vst [vmem:[%s168 + $0x88] sm:$0xff] %v421
        %476 = vst [vmem:[%s168 + $0x90] sm:$0xff] %v424
        %477 = vst [vmem:[%s168 + $0x98] sm:$0xff] %v426
        %478 = vst [vmem:[%s168 + $0xa0] sm:$0xff] %v429
        %479 = vst [vmem:[%s168 + $0xa8] sm:$0xff] %v431
        %480 = vst [vmem:[%s168 + $0xb0] sm:$0xff] %v434
        %481 = vst [vmem:[%s168 + $0xb8] sm:$0xff] %v436
        %482 = vst [vmem:[%s168 + $0xc0] sm:$0xff] %v439
        %483 = vst [vmem:[%s168 + $0xc8] sm:$0xff] %v441
        %484 = vst [vmem:[%s168 + $0xd0] sm:$0xff] %v444
        %485 = vst [vmem:[%s168 + $0xd8] sm:$0xff] %v446
        %486 = vst [vmem:[%s168 + $0xe0] sm:$0xff] %v449
        %487 = vst [vmem:[%s168 + $0xe8] sm:$0xff] %v451
        %488 = vst [vmem:[%s168 + $0xf0] sm:$0xff] %v454
        %489 = vst [vmem:[%s168 + $0xf8] sm:$0xff] %v456
        %v490 = vadd.f32 %v379, %v381
        %v491 = vadd.f32 %v490, %v384
        %v492 = vadd.f32 %v491, %v386
        %v493 = vadd.f32 %v492, %v389
        %v494 = vadd.f32 %v493, %v391
        %v495 = vadd.f32 %v494, %v394
        %v496 = vadd.f32 %v495, %v396
        %v497 = vadd.f32 %v496, %v399
        %v498 = vadd.f32 %v497, %v401
        %v499 = vadd.f32 %v498, %v404
        %v500 = vadd.f32 %v499, %v406
        %v501 = vadd.f32 %v500, %v409
        %v502 = vadd.f32 %v501, %v411
        %v503 = vadd.f32 %v502, %v414
        %v504 = vadd.f32 %v503, %v416
        %v505 = vadd.f32 %v504, %v419
        %v506 = vadd.f32 %v505, %v421
        %v507 = vadd.f32 %v506, %v424
        %v508 = vadd.f32 %v507, %v426
        %v509 = vadd.f32 %v508, %v429
        %v510 = vadd.f32 %v509, %v431
        %v511 = vadd.f32 %v510, %v434
        %v512 = vadd.f32 %v511, %v436
        %v513 = vadd.f32 %v512, %v439
        %v514 = vadd.f32 %v513, %v441
        %v515 = vadd.f32 %v514, %v444
        %v516 = vadd.f32 %v515, %v446
        %v517 = vadd.f32 %v516, %v449
        %v518 = vadd.f32 %v517, %v451
        %v519 = vadd.f32 %v518, %v454
        %v520 = vadd.f32 %v519, %v456
        %v521 = vrot.slane %v520, 4
        %v522 = vadd.f32 %v520, %v521
        %v523 = vrot.slane %v522, 2
        %v524 = vadd.f32 %v522, %v523
        %v525 = vrot.slane %v524, 1
        %v526 = vadd.f32 %v524, %v525
        %v527 = vmul.f32 %v379, %v379
        %v528 = vmul.f32 %v381, %v381
        %v529 = vmul.f32 %v384, %v384
        %v530 = vmul.f32 %v386, %v386
        %v531 = vmul.f32 %v389, %v389
        %v532 = vmul.f32 %v391, %v391
        %v533 = vmul.f32 %v394, %v394
        %v534 = vmul.f32 %v396, %v396
        %v535 = vmul.f32 %v399, %v399
        %v536 = vmul.f32 %v401, %v401
        %v537 = vmul.f32 %v404, %v404
        %v538 = vmul.f32 %v406, %v406
        %v539 = vmul.f32 %v409, %v409
        %v540 = vmul.f32 %v411, %v411
        %v541 = vmul.f32 %v414, %v414
        %v542 = vmul.f32 %v416, %v416
        %v543 = vmul.f32 %v419, %v419
        %v544 = vmul.f32 %v421, %v421
        %v545 = vmul.f32 %v424, %v424
        %v546 = vmul.f32 %v426, %v426
        %v547 = vmul.f32 %v429, %v429
        %v548 = vmul.f32 %v431, %v431
        %v549 = vmul.f32 %v434, %v434
        %v550 = vmul.f32 %v436, %v436
        %v551 = vmul.f32 %v439, %v439
        %v552 = vmul.f32 %v441, %v441
        %v553 = vmul.f32 %v444, %v444
        %v554 = vmul.f32 %v446, %v446
        %v555 = vmul.f32 %v449, %v449
        %v556 = vmul.f32 %v451, %v451
        %v557 = vmul.f32 %v454, %v454
        %v558 = vmul.f32 %v456, %v456
        %v559 = vadd.f32 %v527, %v528
        %v560 = vadd.f32 %v559, %v529
        %v561 = vadd.f32 %v560, %v530
        %v562 = vadd.f32 %v561, %v531
        %v563 = vadd.f32 %v562, %v532
        %v564 = vadd.f32 %v563, %v533
        %v565 = vadd.f32 %v564, %v534
        %v566 = vadd.f32 %v565, %v535
        %v567 = vadd.f32 %v566, %v536
        %v568 = vadd.f32 %v567, %v537
        %v569 = vadd.f32 %v568, %v538
        %v570 = vadd.f32 %v569, %v539
        %v571 = vadd.f32 %v570, %v540
        %v572 = vadd.f32 %v571, %v541
        %v573 = vadd.f32 %v572, %v542
        %v574 = vadd.f32 %v573, %v543
        %v575 = vadd.f32 %v574, %v544
        %v576 = vadd.f32 %v575, %v545
        %v577 = vadd.f32 %v576, %v546
        %v578 = vadd.f32 %v577, %v547
        %v579 = vadd.f32 %v578, %v548
        %v580 = vadd.f32 %v579, %v549
        %v581 = vadd.f32 %v580, %v550
        %v582 = vadd.f32 %v581, %v551
        %v583 = vadd.f32 %v582, %v552
        %v584 = vadd.f32 %v583, %v553
        %v585 = vadd.f32 %v584, %v554
        %v586 = vadd.f32 %v585, %v555
        %v587 = vadd.f32 %v586, %v556
        %v588 = vadd.f32 %v587, %v557
        %v589 = vadd.f32 %v588, %v558
        %v590 = vrot.slane %v589, 4
        %v591 = vadd.f32 %v589, %v590
        %v592 = vrot.slane %v591, 2
        %v593 = vadd.f32 %v591, %v592
        %v594 = vrot.slane %v593, 1
        %v595 = vadd.f32 %v593, %v594
        %vm596 = vcmask 1040384
        %v597 = vsel %vm596, %v526, %v595
        %vm598 = vcmask 1041408
        %v599 = vsel %vm598, %v597, 0.0
        %600 = vst [vmem:[%s175] sm:$0xff] %v599
        %s601 = sand.u32 %s76, 1
        %s602 = scalar_lea.sflag [#allocation3], %s601
        %s603 = sand.u32 %s76, 1
        %s604 = smul.addr %s603, 256
        %s605 = scalar_lea.vmem [#allocation2], %s604
        %s606 = sand.u32 %s102, 1
        %s607 = scalar_lea.sflag [#allocation5], %s606
        %s608 = sand.u32 %s102, 1
        %s609 = smul.addr %s608, 8
        %s610 = scalar_lea.vmem [#allocation4], %s609
        // Predicated region
        $region29: #{tpu_custom_call.1} parent=27 // pred_check
          %p611 = pneg %p86
        $region30: #{tpu_custom_call.1} parent=27 // pred_check_branch
          %613 = sbr.rel (%p611) target = $region32
        $region31: #{tpu_custom_call.1} parent=27 // pred_region
          %s614 = smul.u32 32, %s21
          %616 = vsyncadd %s602, 0
          %s617 = smul.addr %s614, 8
          %s618 = scalar_lea.hbm %s2, %s617
          %s619 = sshll.u32 %s605, 4
          %s620 = int_to_ptr.vmem [resolvable:$true] %s619
          %s621 = sshll.u32 %s618, 4
          %s622 = int_to_ptr.hbm [resolvable:$true] %s621
          %627 = dma.vmem_to_hbm [thread:$0]  %s620, 4096, %s622, %s602, 128, 128, 8
        $region32: #{tpu_custom_call.1} parent=27 // pred_fallthru
          _
        // Predicated region
        $region33: #{tpu_custom_call.1} parent=27 // pred_check
          %p628 = pneg %p112
        $region34: #{tpu_custom_call.1} parent=27 // pred_check_branch
          %630 = sbr.rel (%p628) target = $region36
        $region35: #{tpu_custom_call.1} parent=27 // pred_region
          %632 = vsyncadd %s607, 0
          %s633 = smul.addr %s21, 8
          %s634 = scalar_lea.hbm %s3, %s633
          %s636 = sshll.u32 %s610, 4
          %s637 = int_to_ptr.vmem [resolvable:$true] %s636
          %s638 = sshll.u32 %s634, 4
          %s639 = int_to_ptr.hbm [resolvable:$true] %s638
          %641 = dma.vmem_to_hbm [thread:$0]  %s637, 128, %s639, %s607
        $region36: #{tpu_custom_call.1} parent=27 // pred_fallthru
          _
      $region28: #{tpu_custom_call.1} parent=5 // pred_fallthru
        _
      %p642 = scmp.le.s32.totalorder 2, %s16
      // Predicated region
      $region37: #{tpu_custom_call.1} parent=5 // pred_check
        %p643 = pneg %p642
      $region38: #{tpu_custom_call.1} parent=5 // pred_check_branch
        %645 = sbr.rel (%p643) target = $region40
      $region39: #{tpu_custom_call.1} parent=5 // pred_region
        %s646 = ssub.s32 %s16, 2
        // Predicated region
        $region41: #{tpu_custom_call.1} parent=39 // pred_check
          %p647 = pneg %p92
        $region42: #{tpu_custom_call.1} parent=39 // pred_check_branch
          %649 = sbr.rel (%p647) target = $region44
        $region43: #{tpu_custom_call.1} parent=39 // pred_region
          %s650 = sand.u32 %s77, 1
          %s651 = scalar_lea.sflag [#allocation3], %s650
          %s652 = sand.u32 %s77, 1
          %s653 = smul.addr %s652, 256
          %s654 = scalar_lea.vmem [#allocation2], %s653
          %656 = dma.done %s651, 4096
        $region44: #{tpu_custom_call.1} parent=39 // pred_fallthru
          _
        // Predicated region
        $region45: #{tpu_custom_call.1} parent=39 // pred_check
          %p657 = pneg %p118
        $region46: #{tpu_custom_call.1} parent=39 // pred_check_branch
          %659 = sbr.rel (%p657) target = $region48
        $region47: #{tpu_custom_call.1} parent=39 // pred_region
          %s660 = sand.u32 %s103, 1
          %s661 = scalar_lea.sflag [#allocation5], %s660
          %s662 = sand.u32 %s103, 1
          %s663 = smul.addr %s662, 8
          %s664 = scalar_lea.vmem [#allocation4], %s663
          %666 = dma.done %s661, 128
        $region48: #{tpu_custom_call.1} parent=39 // pred_fallthru
          _
      $region40: #{tpu_custom_call.1} parent=5 // pred_fallthru
        _
    $region6: #{tpu_custom_call.1} parent=1 // loop_footer
      %s20 = sadd.s32 1, %s16
    $region7: #{tpu_custom_call.1} parent=1 // loop_footer_branch
      %15 = sbr.rel target = $region3
    $region8: #{tpu_custom_call.1} parent=1 // loop_exit
      _
    %667 = vsyncpa [#allocation3], 1
    %s668 = scalar_lea.sflag [#allocation3], 1
    %669 = vsyncpa %s668, 1
    %670 = vsyncpa [#allocation5], 1
    %s671 = scalar_lea.sflag [#allocation5], 1
    %672 = vsyncpa %s671, 1

</llo_original>
